<compile_context>
chip_gen: v7x
topology: tpu7x:2x2x1
jax: 0.10.0
libtpu: 0.0.40
codegen_flags: <defaults>
</compile_context>

<pallas_src>
import jax
import jax.numpy as jnp
from jax.experimental import pallas as pl
from jax.experimental.pallas import tpu as pltpu


def cbow_kernel(idx_ref,            # SMEM  (CTX,)   int32  (scalar prefetch)
                emb_hbm,            # HBM   (V, D)   f32    (raw ref, pl.ANY)
                w1_ref,             # VMEM  (D, H)   bf16
                b1_ref,             # VMEM  (1, H)   f32
                w2_ref,             # VMEM  (H, TV)  bf16   (tile j)
                b2_ref,             # VMEM  (1, TV)  f32    (tile j)
                out_ref,            # VMEM  (1, V)   f32    (resident accumulator)
                gather_buf,         # VMEM  (CTX, D) f32    scratch
                h_ref,              # VMEM  (1, H)   f32    scratch
                logits_buf,         # VMEM  (nT,1,TV)f32    scratch
                sem):               # DMA semaphores (CTX,)
    j = pl.program_id(0)
    n_tiles = pl.num_programs(0)
    ctx = gather_buf.shape[0]
    vocab = emb_hbm.shape[0]
    tv = w2_ref.shape[1]

    # ---- step 0: DMA-gather CTX embedding rows, sum, linear1 + ReLU ----------
    @pl.when(j == 0)
    def _():
        copies = []
        for i in range(ctx):                                   # static unroll
            tok = jnp.minimum(jnp.maximum(idx_ref[i], 0), vocab - 1)
            cp = pltpu.make_async_copy(
                emb_hbm.at[pl.ds(tok, 1)],                     # (1, D) HBM row
                gather_buf.at[pl.ds(i, 1)],                    # (1, D) VMEM row
                sem.at[i])
            cp.start()
            copies.append(cp)
        for cp in copies:
            cp.wait()

        embeds = jnp.sum(gather_buf[...], axis=0, keepdims=True)   # (1, D) f32
        h = jnp.dot(embeds.astype(jnp.bfloat16), w1_ref[...],
                    preferred_element_type=jnp.float32) + b1_ref[...]
        h_ref[...] = jnp.maximum(h, 0.0)

    # ---- every step: one (H, TV) tile of linear2 ------------------------------
    logits = jnp.dot(h_ref[...].astype(jnp.bfloat16), w2_ref[...],
                     preferred_element_type=jnp.float32) + b2_ref[...]
    logits_buf[j] = logits                                     # (1, TV) f32

    # ---- last step: log-softmax over the fully assembled row ------------------
    @pl.when(j == n_tiles - 1)
    def _():
        buf = logits_buf[...]                                  # (nT, 1, TV) f32
        m = jnp.max(buf)
        lse = jnp.log(jnp.sum(jnp.exp(buf - m)))
        norm = m + lse
        for t in range(n_tiles):                               # static lane offsets
            out_ref[:, t * tv:(t + 1) * tv] = logits_buf[t] - norm


def cbow_forward(token_ids, emb, w1_bf, b1, w2_bf, b2, *, tv=None):
    V, D = emb.shape
    H = w1_bf.shape[1]
    CTX = token_ids.shape[0]
    assert w1_bf.shape == (D, H) and b1.shape == (1, H)
    assert w2_bf.shape == (H, V) and b2.shape == (1, V)
    assert V % 128 == 0, "vocab size must be a multiple of 128 for lane-dense tiles"

    if tv is None:
        tv = min(V, 2048)
    while V % tv != 0 or tv % 128 != 0:        # shrink to a clean divisor
        tv -= 128
    n_tiles = V // tv

    grid_spec = pltpu.PrefetchScalarGridSpec(
        num_scalar_prefetch=1,                                  # token_ids -> SMEM
        grid=(n_tiles,),
        in_specs=[
            pl.BlockSpec(memory_space=pl.ANY),                  # emb stays in HBM
            pl.BlockSpec((D, H), lambda j, ids: (0, 0)),        # w1 (bf16)
            pl.BlockSpec((1, H), lambda j, ids: (0, 0)),        # b1
            pl.BlockSpec((H, tv), lambda j, ids: (0, j)),       # w2 tile (bf16)
            pl.BlockSpec((1, tv), lambda j, ids: (0, j)),       # b2 tile
        ],
        out_specs=pl.BlockSpec((1, V), lambda j, ids: (0, 0)),  # resident output
        scratch_shapes=[
            pltpu.VMEM((CTX, D), jnp.float32),                  # gathered rows
            pltpu.VMEM((1, H), jnp.float32),                    # hidden h
            pltpu.VMEM((n_tiles, 1, tv), jnp.float32),          # logits tiles
            pltpu.SemaphoreType.DMA((CTX,)),
        ],
    )

    cost = pl.CostEstimate(
        flops=2 * (D * H + H * V),
        transcendentals=V,
        bytes_accessed=(CTX * D * 4          # gathered embedding rows
                        + D * H * 2 + H * 4  # w1 (bf16) + b1
                        + H * V * 2 + V * 4  # w2 (bf16) + b2
                        + V * 4),            # output row
    )

    return pl.pallas_call(
        cbow_kernel,
        out_shape=jax.ShapeDtypeStruct((1, V), jnp.float32),
        grid_spec=grid_spec,
        compiler_params=pltpu.CompilerParams(
            dimension_semantics=("arbitrary",)),
        cost_estimate=cost,
    )(token_ids, emb, w1_bf, b1, w2_bf, b2)


def cbow_reference(token_ids, emb, w1_bf, b1, w2_bf, b2):
    # Pure-JAX reference matching the kernel's dtype flow (bf16 matmul operands,
    # f32 accumulation and f32 softmax math).
    embeds = jnp.sum(emb[token_ids].astype(jnp.float32), axis=0, keepdims=True)
    h = jnp.dot(embeds.astype(jnp.bfloat16).astype(jnp.float32),
                w1_bf.astype(jnp.float32)) + b1
    h = jnp.maximum(h, 0.0)
    logits = jnp.dot(h.astype(jnp.bfloat16).astype(jnp.float32),
                     w2_bf.astype(jnp.float32)) + b2
    return jax.nn.log_softmax(logits, axis=-1)


if __name__ == "__main__":
    VOCAB = 256        # vocab.get_size()
    EMB_DIM = 128      # embedding_dim
    HIDDEN = 128       # fixed by module (Linear(embedding_dim, 128))
    CTX = 8            # context window length (len(inputs))

    key = jax.random.PRNGKey(0)
    k_emb, k_w1, k_b1, k_w2, k_b2, k_ids = jax.random.split(key, 6)

    emb = jax.random.normal(k_emb, (VOCAB, EMB_DIM), jnp.float32) * 0.1
    w1 = jax.random.normal(k_w1, (EMB_DIM, HIDDEN), jnp.float32) * 0.05
    b1 = jax.random.normal(k_b1, (1, HIDDEN), jnp.float32) * 0.01
    w2 = jax.random.normal(k_w2, (HIDDEN, VOCAB), jnp.float32) * 0.05
    b2 = jax.random.normal(k_b2, (1, VOCAB), jnp.float32) * 0.01
    token_ids = jax.random.randint(k_ids, (CTX,), 0, VOCAB, jnp.int32)

    # Cast matmul weights to bf16 once, outside the kernel (halves weight DMA).
    w1_bf = w1.astype(jnp.bfloat16)
    w2_bf = w2.astype(jnp.bfloat16)

    # tv=128 -> two vocab tiles, exercises the V-tiled pipeline.
    out = cbow_forward(token_ids, emb, w1_bf, b1, w2_bf, b2, tv=128)
    out = jax.block_until_ready(out)

    ref = cbow_reference(token_ids, emb, w1_bf, b1, w2_bf, b2)
    assert out.shape == (1, VOCAB)
    assert jnp.allclose(out, ref, atol=2e-3, rtol=2e-3), "mismatch vs reference"

    print("KERNEL_OK")
</pallas_src>

<mosaic_0001>
module attributes {stable_mosaic.version = 11 : i64} {
  func.func @cbow_kernel(%arg0: i32, %arg1: memref<8xi32, #tpu.memory_space<smem>>, %arg2: memref<256x128xf32, #tpu.memory_space<any>>, %arg3: memref<128x128xbf16, #tpu.memory_space<vmem>>, %arg4: memref<1x128xf32, #tpu.memory_space<vmem>>, %arg5: memref<128x128xbf16, #tpu.memory_space<vmem>>, %arg6: memref<1x128xf32, #tpu.memory_space<vmem>>, %arg7: memref<1x256xf32, #tpu.memory_space<vmem>>, %arg8: memref<8x128xf32, #tpu.memory_space<vmem>>, %arg9: memref<1x128xf32, #tpu.memory_space<vmem>>, %arg10: memref<2x1x128xf32, #tpu.memory_space<vmem>>, %arg11: memref<8x!tpu.dma_semaphore, #tpu.memory_space<semaphore_mem>>) attributes {dimension_semantics = [#tpu.dimension_semantics<arbitrary>], iteration_bounds = array<i64: 2>, scalar_prefetch = 1 : i64, scratch_operands = 4 : i64, tpu.core_type = #tpu.core_type<tc>, window_params = [{}, {pipeline_mode = #tpu.pipeline_mode<synchronous>, transform_indices = @transform_1, window_bounds = array<i64: 128, 128>}, {pipeline_mode = #tpu.pipeline_mode<synchronous>, transform_indices = @transform_2, window_bounds = array<i64: 1, 128>}, {transform_indices = @transform_3, window_bounds = array<i64: 128, 128>}, {transform_indices = @transform_4, window_bounds = array<i64: 1, 128>}, {pipeline_mode = #tpu.pipeline_mode<synchronous>, transform_indices = @transform_5, window_bounds = array<i64: 1, 256>}]} {
    %c0_i32 = arith.constant 0 : i32
    %0 = arith.cmpi eq, %arg0, %c0_i32 : i32
    %1 = arith.extui %0 : i1 to i32
    %c0_i32_0 = arith.constant 0 : i32
    %2 = arith.cmpi ne, %1, %c0_i32_0 : i32
    scf.if %2 {
      %c0_9 = arith.constant 0 : index
      %16 = memref.load %arg1[%c0_9] : memref<8xi32, #tpu.memory_space<smem>>
      %c0_i32_10 = arith.constant 0 : i32
      %17 = arith.maxsi %16, %c0_i32_10 : i32
      %c255_i32 = arith.constant 255 : i32
      %18 = arith.minsi %17, %c255_i32 : i32
      %c0_i32_11 = arith.constant 0 : i32
      %c0_i32_12 = arith.constant 0 : i32
      %19 = tpu.memref_slice %arg2[%18, %c0_i32_12] : memref<256x128xf32, #tpu.memory_space<any>> -> memref<1x128xf32, #tpu.memory_space<any>>
      %c0_i32_13 = arith.constant 0 : i32
      %c0_i32_14 = arith.constant 0 : i32
      %20 = tpu.memref_slice %arg8[%c0_i32_13, %c0_i32_14] : memref<8x128xf32, #tpu.memory_space<vmem>> -> memref<1x128xf32, #tpu.memory_space<vmem>>
      %21 = tpu.memref_slice %arg11[%c0_i32_11] : memref<8x!tpu.dma_semaphore, #tpu.memory_space<semaphore_mem>> -> memref<1x!tpu.dma_semaphore, #tpu.memory_space<semaphore_mem>>
      %22 = tpu.memref_squeeze %21 : memref<1x!tpu.dma_semaphore, #tpu.memory_space<semaphore_mem>> -> memref<!tpu.dma_semaphore, #tpu.memory_space<semaphore_mem>>
      tpu.enqueue_dma source(%19 : memref<1x128xf32, #tpu.memory_space<any>>) target(%20 : memref<1x128xf32, #tpu.memory_space<vmem>>) target_semaphore(%22 : memref<!tpu.dma_semaphore, #tpu.memory_space<semaphore_mem>>)
      %c1 = arith.constant 1 : index
      %23 = memref.load %arg1[%c1] : memref<8xi32, #tpu.memory_space<smem>>
      %c0_i32_15 = arith.constant 0 : i32
      %24 = arith.maxsi %23, %c0_i32_15 : i32
      %c255_i32_16 = arith.constant 255 : i32
      %25 = arith.minsi %24, %c255_i32_16 : i32
      %c1_i32_17 = arith.constant 1 : i32
      %c0_i32_18 = arith.constant 0 : i32
      %26 = tpu.memref_slice %arg2[%25, %c0_i32_18] : memref<256x128xf32, #tpu.memory_space<any>> -> memref<1x128xf32, #tpu.memory_space<any>>
      %c1_i32_19 = arith.constant 1 : i32
      %c0_i32_20 = arith.constant 0 : i32
      %27 = tpu.memref_slice %arg8[%c1_i32_19, %c0_i32_20] : memref<8x128xf32, #tpu.memory_space<vmem>> -> memref<1x128xf32, #tpu.memory_space<vmem>>
      %28 = tpu.memref_slice %arg11[%c1_i32_17] : memref<8x!tpu.dma_semaphore, #tpu.memory_space<semaphore_mem>> -> memref<1x!tpu.dma_semaphore, #tpu.memory_space<semaphore_mem>>
      %29 = tpu.memref_squeeze %28 : memref<1x!tpu.dma_semaphore, #tpu.memory_space<semaphore_mem>> -> memref<!tpu.dma_semaphore, #tpu.memory_space<semaphore_mem>>
      tpu.enqueue_dma source(%26 : memref<1x128xf32, #tpu.memory_space<any>>) target(%27 : memref<1x128xf32, #tpu.memory_space<vmem>>) target_semaphore(%29 : memref<!tpu.dma_semaphore, #tpu.memory_space<semaphore_mem>>)
      %c2 = arith.constant 2 : index
      %30 = memref.load %arg1[%c2] : memref<8xi32, #tpu.memory_space<smem>>
      %c0_i32_21 = arith.constant 0 : i32
      %31 = arith.maxsi %30, %c0_i32_21 : i32
      %c255_i32_22 = arith.constant 255 : i32
      %32 = arith.minsi %31, %c255_i32_22 : i32
      %c2_i32 = arith.constant 2 : i32
      %c0_i32_23 = arith.constant 0 : i32
      %33 = tpu.memref_slice %arg2[%32, %c0_i32_23] : memref<256x128xf32, #tpu.memory_space<any>> -> memref<1x128xf32, #tpu.memory_space<any>>
      %c2_i32_24 = arith.constant 2 : i32
      %c0_i32_25 = arith.constant 0 : i32
      %34 = tpu.memref_slice %arg8[%c2_i32_24, %c0_i32_25] : memref<8x128xf32, #tpu.memory_space<vmem>> -> memref<1x128xf32, #tpu.memory_space<vmem>>
      %35 = tpu.memref_slice %arg11[%c2_i32] : memref<8x!tpu.dma_semaphore, #tpu.memory_space<semaphore_mem>> -> memref<1x!tpu.dma_semaphore, #tpu.memory_space<semaphore_mem>>
      %36 = tpu.memref_squeeze %35 : memref<1x!tpu.dma_semaphore, #tpu.memory_space<semaphore_mem>> -> memref<!tpu.dma_semaphore, #tpu.memory_space<semaphore_mem>>
      tpu.enqueue_dma source(%33 : memref<1x128xf32, #tpu.memory_space<any>>) target(%34 : memref<1x128xf32, #tpu.memory_space<vmem>>) target_semaphore(%36 : memref<!tpu.dma_semaphore, #tpu.memory_space<semaphore_mem>>)
      %c3 = arith.constant 3 : index
      %37 = memref.load %arg1[%c3] : memref<8xi32, #tpu.memory_space<smem>>
      %c0_i32_26 = arith.constant 0 : i32
      %38 = arith.maxsi %37, %c0_i32_26 : i32
      %c255_i32_27 = arith.constant 255 : i32
      %39 = arith.minsi %38, %c255_i32_27 : i32
      %c3_i32 = arith.constant 3 : i32
      %c0_i32_28 = arith.constant 0 : i32
      %40 = tpu.memref_slice %arg2[%39, %c0_i32_28] : memref<256x128xf32, #tpu.memory_space<any>> -> memref<1x128xf32, #tpu.memory_space<any>>
      %c3_i32_29 = arith.constant 3 : i32
      %c0_i32_30 = arith.constant 0 : i32
      %41 = tpu.memref_slice %arg8[%c3_i32_29, %c0_i32_30] : memref<8x128xf32, #tpu.memory_space<vmem>> -> memref<1x128xf32, #tpu.memory_space<vmem>>
      %42 = tpu.memref_slice %arg11[%c3_i32] : memref<8x!tpu.dma_semaphore, #tpu.memory_space<semaphore_mem>> -> memref<1x!tpu.dma_semaphore, #tpu.memory_space<semaphore_mem>>
      %43 = tpu.memref_squeeze %42 : memref<1x!tpu.dma_semaphore, #tpu.memory_space<semaphore_mem>> -> memref<!tpu.dma_semaphore, #tpu.memory_space<semaphore_mem>>
      tpu.enqueue_dma source(%40 : memref<1x128xf32, #tpu.memory_space<any>>) target(%41 : memref<1x128xf32, #tpu.memory_space<vmem>>) target_semaphore(%43 : memref<!tpu.dma_semaphore, #tpu.memory_space<semaphore_mem>>)
      %c4 = arith.constant 4 : index
      %44 = memref.load %arg1[%c4] : memref<8xi32, #tpu.memory_space<smem>>
      %c0_i32_31 = arith.constant 0 : i32
      %45 = arith.maxsi %44, %c0_i32_31 : i32
      %c255_i32_32 = arith.constant 255 : i32
      %46 = arith.minsi %45, %c255_i32_32 : i32
      %c4_i32 = arith.constant 4 : i32
      %c0_i32_33 = arith.constant 0 : i32
      %47 = tpu.memref_slice %arg2[%46, %c0_i32_33] : memref<256x128xf32, #tpu.memory_space<any>> -> memref<1x128xf32, #tpu.memory_space<any>>
      %c4_i32_34 = arith.constant 4 : i32
      %c0_i32_35 = arith.constant 0 : i32
      %48 = tpu.memref_slice %arg8[%c4_i32_34, %c0_i32_35] : memref<8x128xf32, #tpu.memory_space<vmem>> -> memref<1x128xf32, #tpu.memory_space<vmem>>
      %49 = tpu.memref_slice %arg11[%c4_i32] : memref<8x!tpu.dma_semaphore, #tpu.memory_space<semaphore_mem>> -> memref<1x!tpu.dma_semaphore, #tpu.memory_space<semaphore_mem>>
      %50 = tpu.memref_squeeze %49 : memref<1x!tpu.dma_semaphore, #tpu.memory_space<semaphore_mem>> -> memref<!tpu.dma_semaphore, #tpu.memory_space<semaphore_mem>>
      tpu.enqueue_dma source(%47 : memref<1x128xf32, #tpu.memory_space<any>>) target(%48 : memref<1x128xf32, #tpu.memory_space<vmem>>) target_semaphore(%50 : memref<!tpu.dma_semaphore, #tpu.memory_space<semaphore_mem>>)
      %c5 = arith.constant 5 : index
      %51 = memref.load %arg1[%c5] : memref<8xi32, #tpu.memory_space<smem>>
      %c0_i32_36 = arith.constant 0 : i32
      %52 = arith.maxsi %51, %c0_i32_36 : i32
      %c255_i32_37 = arith.constant 255 : i32
      %53 = arith.minsi %52, %c255_i32_37 : i32
      %c5_i32 = arith.constant 5 : i32
      %c0_i32_38 = arith.constant 0 : i32
      %54 = tpu.memref_slice %arg2[%53, %c0_i32_38] : memref<256x128xf32, #tpu.memory_space<any>> -> memref<1x128xf32, #tpu.memory_space<any>>
      %c5_i32_39 = arith.constant 5 : i32
      %c0_i32_40 = arith.constant 0 : i32
      %55 = tpu.memref_slice %arg8[%c5_i32_39, %c0_i32_40] : memref<8x128xf32, #tpu.memory_space<vmem>> -> memref<1x128xf32, #tpu.memory_space<vmem>>
      %56 = tpu.memref_slice %arg11[%c5_i32] : memref<8x!tpu.dma_semaphore, #tpu.memory_space<semaphore_mem>> -> memref<1x!tpu.dma_semaphore, #tpu.memory_space<semaphore_mem>>
      %57 = tpu.memref_squeeze %56 : memref<1x!tpu.dma_semaphore, #tpu.memory_space<semaphore_mem>> -> memref<!tpu.dma_semaphore, #tpu.memory_space<semaphore_mem>>
      tpu.enqueue_dma source(%54 : memref<1x128xf32, #tpu.memory_space<any>>) target(%55 : memref<1x128xf32, #tpu.memory_space<vmem>>) target_semaphore(%57 : memref<!tpu.dma_semaphore, #tpu.memory_space<semaphore_mem>>)
      %c6 = arith.constant 6 : index
      %58 = memref.load %arg1[%c6] : memref<8xi32, #tpu.memory_space<smem>>
      %c0_i32_41 = arith.constant 0 : i32
      %59 = arith.maxsi %58, %c0_i32_41 : i32
      %c255_i32_42 = arith.constant 255 : i32
      %60 = arith.minsi %59, %c255_i32_42 : i32
      %c6_i32 = arith.constant 6 : i32
      %c0_i32_43 = arith.constant 0 : i32
      %61 = tpu.memref_slice %arg2[%60, %c0_i32_43] : memref<256x128xf32, #tpu.memory_space<any>> -> memref<1x128xf32, #tpu.memory_space<any>>
      %c6_i32_44 = arith.constant 6 : i32
      %c0_i32_45 = arith.constant 0 : i32
      %62 = tpu.memref_slice %arg8[%c6_i32_44, %c0_i32_45] : memref<8x128xf32, #tpu.memory_space<vmem>> -> memref<1x128xf32, #tpu.memory_space<vmem>>
      %63 = tpu.memref_slice %arg11[%c6_i32] : memref<8x!tpu.dma_semaphore, #tpu.memory_space<semaphore_mem>> -> memref<1x!tpu.dma_semaphore, #tpu.memory_space<semaphore_mem>>
      %64 = tpu.memref_squeeze %63 : memref<1x!tpu.dma_semaphore, #tpu.memory_space<semaphore_mem>> -> memref<!tpu.dma_semaphore, #tpu.memory_space<semaphore_mem>>
      tpu.enqueue_dma source(%61 : memref<1x128xf32, #tpu.memory_space<any>>) target(%62 : memref<1x128xf32, #tpu.memory_space<vmem>>) target_semaphore(%64 : memref<!tpu.dma_semaphore, #tpu.memory_space<semaphore_mem>>)
      %c7 = arith.constant 7 : index
      %65 = memref.load %arg1[%c7] : memref<8xi32, #tpu.memory_space<smem>>
      %c0_i32_46 = arith.constant 0 : i32
      %66 = arith.maxsi %65, %c0_i32_46 : i32
      %c255_i32_47 = arith.constant 255 : i32
      %67 = arith.minsi %66, %c255_i32_47 : i32
      %c7_i32 = arith.constant 7 : i32
      %c0_i32_48 = arith.constant 0 : i32
      %68 = tpu.memref_slice %arg2[%67, %c0_i32_48] : memref<256x128xf32, #tpu.memory_space<any>> -> memref<1x128xf32, #tpu.memory_space<any>>
      %c7_i32_49 = arith.constant 7 : i32
      %c0_i32_50 = arith.constant 0 : i32
      %69 = tpu.memref_slice %arg8[%c7_i32_49, %c0_i32_50] : memref<8x128xf32, #tpu.memory_space<vmem>> -> memref<1x128xf32, #tpu.memory_space<vmem>>
      %70 = tpu.memref_slice %arg11[%c7_i32] : memref<8x!tpu.dma_semaphore, #tpu.memory_space<semaphore_mem>> -> memref<1x!tpu.dma_semaphore, #tpu.memory_space<semaphore_mem>>
      %71 = tpu.memref_squeeze %70 : memref<1x!tpu.dma_semaphore, #tpu.memory_space<semaphore_mem>> -> memref<!tpu.dma_semaphore, #tpu.memory_space<semaphore_mem>>
      tpu.enqueue_dma source(%68 : memref<1x128xf32, #tpu.memory_space<any>>) target(%69 : memref<1x128xf32, #tpu.memory_space<vmem>>) target_semaphore(%71 : memref<!tpu.dma_semaphore, #tpu.memory_space<semaphore_mem>>)
      %c0_i32_51 = arith.constant 0 : i32
      %c0_i32_52 = arith.constant 0 : i32
      %72 = tpu.memref_slice %arg2[%18, %c0_i32_52] : memref<256x128xf32, #tpu.memory_space<any>> -> memref<1x128xf32, #tpu.memory_space<any>>
      %c0_i32_53 = arith.constant 0 : i32
      %c0_i32_54 = arith.constant 0 : i32
      %73 = tpu.memref_slice %arg8[%c0_i32_53, %c0_i32_54] : memref<8x128xf32, #tpu.memory_space<vmem>> -> memref<1x128xf32, #tpu.memory_space<vmem>>
      %74 = tpu.memref_slice %arg11[%c0_i32_51] : memref<8x!tpu.dma_semaphore, #tpu.memory_space<semaphore_mem>> -> memref<1x!tpu.dma_semaphore, #tpu.memory_space<semaphore_mem>>
      %75 = tpu.memref_squeeze %74 : memref<1x!tpu.dma_semaphore, #tpu.memory_space<semaphore_mem>> -> memref<!tpu.dma_semaphore, #tpu.memory_space<semaphore_mem>>
      tpu.wait_dma2 semaphore(%75 : memref<!tpu.dma_semaphore, #tpu.memory_space<semaphore_mem>>) src(%72 : memref<1x128xf32, #tpu.memory_space<any>>) dst(%73 : memref<1x128xf32, #tpu.memory_space<vmem>>)
      %c1_i32_55 = arith.constant 1 : i32
      %c0_i32_56 = arith.constant 0 : i32
      %76 = tpu.memref_slice %arg2[%25, %c0_i32_56] : memref<256x128xf32, #tpu.memory_space<any>> -> memref<1x128xf32, #tpu.memory_space<any>>
      %c1_i32_57 = arith.constant 1 : i32
      %c0_i32_58 = arith.constant 0 : i32
      %77 = tpu.memref_slice %arg8[%c1_i32_57, %c0_i32_58] : memref<8x128xf32, #tpu.memory_space<vmem>> -> memref<1x128xf32, #tpu.memory_space<vmem>>
      %78 = tpu.memref_slice %arg11[%c1_i32_55] : memref<8x!tpu.dma_semaphore, #tpu.memory_space<semaphore_mem>> -> memref<1x!tpu.dma_semaphore, #tpu.memory_space<semaphore_mem>>
      %79 = tpu.memref_squeeze %78 : memref<1x!tpu.dma_semaphore, #tpu.memory_space<semaphore_mem>> -> memref<!tpu.dma_semaphore, #tpu.memory_space<semaphore_mem>>
      tpu.wait_dma2 semaphore(%79 : memref<!tpu.dma_semaphore, #tpu.memory_space<semaphore_mem>>) src(%76 : memref<1x128xf32, #tpu.memory_space<any>>) dst(%77 : memref<1x128xf32, #tpu.memory_space<vmem>>)
      %c2_i32_59 = arith.constant 2 : i32
      %c0_i32_60 = arith.constant 0 : i32
      %80 = tpu.memref_slice %arg2[%32, %c0_i32_60] : memref<256x128xf32, #tpu.memory_space<any>> -> memref<1x128xf32, #tpu.memory_space<any>>
      %c2_i32_61 = arith.constant 2 : i32
      %c0_i32_62 = arith.constant 0 : i32
      %81 = tpu.memref_slice %arg8[%c2_i32_61, %c0_i32_62] : memref<8x128xf32, #tpu.memory_space<vmem>> -> memref<1x128xf32, #tpu.memory_space<vmem>>
      %82 = tpu.memref_slice %arg11[%c2_i32_59] : memref<8x!tpu.dma_semaphore, #tpu.memory_space<semaphore_mem>> -> memref<1x!tpu.dma_semaphore, #tpu.memory_space<semaphore_mem>>
      %83 = tpu.memref_squeeze %82 : memref<1x!tpu.dma_semaphore, #tpu.memory_space<semaphore_mem>> -> memref<!tpu.dma_semaphore, #tpu.memory_space<semaphore_mem>>
      tpu.wait_dma2 semaphore(%83 : memref<!tpu.dma_semaphore, #tpu.memory_space<semaphore_mem>>) src(%80 : memref<1x128xf32, #tpu.memory_space<any>>) dst(%81 : memref<1x128xf32, #tpu.memory_space<vmem>>)
      %c3_i32_63 = arith.constant 3 : i32
      %c0_i32_64 = arith.constant 0 : i32
      %84 = tpu.memref_slice %arg2[%39, %c0_i32_64] : memref<256x128xf32, #tpu.memory_space<any>> -> memref<1x128xf32, #tpu.memory_space<any>>
      %c3_i32_65 = arith.constant 3 : i32
      %c0_i32_66 = arith.constant 0 : i32
      %85 = tpu.memref_slice %arg8[%c3_i32_65, %c0_i32_66] : memref<8x128xf32, #tpu.memory_space<vmem>> -> memref<1x128xf32, #tpu.memory_space<vmem>>
      %86 = tpu.memref_slice %arg11[%c3_i32_63] : memref<8x!tpu.dma_semaphore, #tpu.memory_space<semaphore_mem>> -> memref<1x!tpu.dma_semaphore, #tpu.memory_space<semaphore_mem>>
      %87 = tpu.memref_squeeze %86 : memref<1x!tpu.dma_semaphore, #tpu.memory_space<semaphore_mem>> -> memref<!tpu.dma_semaphore, #tpu.memory_space<semaphore_mem>>
      tpu.wait_dma2 semaphore(%87 : memref<!tpu.dma_semaphore, #tpu.memory_space<semaphore_mem>>) src(%84 : memref<1x128xf32, #tpu.memory_space<any>>) dst(%85 : memref<1x128xf32, #tpu.memory_space<vmem>>)
      %c4_i32_67 = arith.constant 4 : i32
      %c0_i32_68 = arith.constant 0 : i32
      %88 = tpu.memref_slice %arg2[%46, %c0_i32_68] : memref<256x128xf32, #tpu.memory_space<any>> -> memref<1x128xf32, #tpu.memory_space<any>>
      %c4_i32_69 = arith.constant 4 : i32
      %c0_i32_70 = arith.constant 0 : i32
      %89 = tpu.memref_slice %arg8[%c4_i32_69, %c0_i32_70] : memref<8x128xf32, #tpu.memory_space<vmem>> -> memref<1x128xf32, #tpu.memory_space<vmem>>
      %90 = tpu.memref_slice %arg11[%c4_i32_67] : memref<8x!tpu.dma_semaphore, #tpu.memory_space<semaphore_mem>> -> memref<1x!tpu.dma_semaphore, #tpu.memory_space<semaphore_mem>>
      %91 = tpu.memref_squeeze %90 : memref<1x!tpu.dma_semaphore, #tpu.memory_space<semaphore_mem>> -> memref<!tpu.dma_semaphore, #tpu.memory_space<semaphore_mem>>
      tpu.wait_dma2 semaphore(%91 : memref<!tpu.dma_semaphore, #tpu.memory_space<semaphore_mem>>) src(%88 : memref<1x128xf32, #tpu.memory_space<any>>) dst(%89 : memref<1x128xf32, #tpu.memory_space<vmem>>)
      %c5_i32_71 = arith.constant 5 : i32
      %c0_i32_72 = arith.constant 0 : i32
      %92 = tpu.memref_slice %arg2[%53, %c0_i32_72] : memref<256x128xf32, #tpu.memory_space<any>> -> memref<1x128xf32, #tpu.memory_space<any>>
      %c5_i32_73 = arith.constant 5 : i32
      %c0_i32_74 = arith.constant 0 : i32
      %93 = tpu.memref_slice %arg8[%c5_i32_73, %c0_i32_74] : memref<8x128xf32, #tpu.memory_space<vmem>> -> memref<1x128xf32, #tpu.memory_space<vmem>>
      %94 = tpu.memref_slice %arg11[%c5_i32_71] : memref<8x!tpu.dma_semaphore, #tpu.memory_space<semaphore_mem>> -> memref<1x!tpu.dma_semaphore, #tpu.memory_space<semaphore_mem>>
      %95 = tpu.memref_squeeze %94 : memref<1x!tpu.dma_semaphore, #tpu.memory_space<semaphore_mem>> -> memref<!tpu.dma_semaphore, #tpu.memory_space<semaphore_mem>>
      tpu.wait_dma2 semaphore(%95 : memref<!tpu.dma_semaphore, #tpu.memory_space<semaphore_mem>>) src(%92 : memref<1x128xf32, #tpu.memory_space<any>>) dst(%93 : memref<1x128xf32, #tpu.memory_space<vmem>>)
      %c6_i32_75 = arith.constant 6 : i32
      %c0_i32_76 = arith.constant 0 : i32
      %96 = tpu.memref_slice %arg2[%60, %c0_i32_76] : memref<256x128xf32, #tpu.memory_space<any>> -> memref<1x128xf32, #tpu.memory_space<any>>
      %c6_i32_77 = arith.constant 6 : i32
      %c0_i32_78 = arith.constant 0 : i32
      %97 = tpu.memref_slice %arg8[%c6_i32_77, %c0_i32_78] : memref<8x128xf32, #tpu.memory_space<vmem>> -> memref<1x128xf32, #tpu.memory_space<vmem>>
      %98 = tpu.memref_slice %arg11[%c6_i32_75] : memref<8x!tpu.dma_semaphore, #tpu.memory_space<semaphore_mem>> -> memref<1x!tpu.dma_semaphore, #tpu.memory_space<semaphore_mem>>
      %99 = tpu.memref_squeeze %98 : memref<1x!tpu.dma_semaphore, #tpu.memory_space<semaphore_mem>> -> memref<!tpu.dma_semaphore, #tpu.memory_space<semaphore_mem>>
      tpu.wait_dma2 semaphore(%99 : memref<!tpu.dma_semaphore, #tpu.memory_space<semaphore_mem>>) src(%96 : memref<1x128xf32, #tpu.memory_space<any>>) dst(%97 : memref<1x128xf32, #tpu.memory_space<vmem>>)
      %c7_i32_79 = arith.constant 7 : i32
      %c0_i32_80 = arith.constant 0 : i32
      %100 = tpu.memref_slice %arg2[%67, %c0_i32_80] : memref<256x128xf32, #tpu.memory_space<any>> -> memref<1x128xf32, #tpu.memory_space<any>>
      %c7_i32_81 = arith.constant 7 : i32
      %c0_i32_82 = arith.constant 0 : i32
      %101 = tpu.memref_slice %arg8[%c7_i32_81, %c0_i32_82] : memref<8x128xf32, #tpu.memory_space<vmem>> -> memref<1x128xf32, #tpu.memory_space<vmem>>
      %102 = tpu.memref_slice %arg11[%c7_i32_79] : memref<8x!tpu.dma_semaphore, #tpu.memory_space<semaphore_mem>> -> memref<1x!tpu.dma_semaphore, #tpu.memory_space<semaphore_mem>>
      %103 = tpu.memref_squeeze %102 : memref<1x!tpu.dma_semaphore, #tpu.memory_space<semaphore_mem>> -> memref<!tpu.dma_semaphore, #tpu.memory_space<semaphore_mem>>
      tpu.wait_dma2 semaphore(%103 : memref<!tpu.dma_semaphore, #tpu.memory_space<semaphore_mem>>) src(%100 : memref<1x128xf32, #tpu.memory_space<any>>) dst(%101 : memref<1x128xf32, #tpu.memory_space<vmem>>)
      %c0_83 = arith.constant 0 : index
      %c0_84 = arith.constant 0 : index
      %104 = vector.load %arg8[%c0_83, %c0_84] : memref<8x128xf32, #tpu.memory_space<vmem>>, vector<8x128xf32>
      %cst_85 = arith.constant dense<0.000000e+00> : vector<128xf32>
      %105 = vector.multi_reduction <add>, %104, %cst_85 [0] : vector<8x128xf32> to vector<128xf32>
      %106 = vector.shape_cast %105 : vector<128xf32> to vector<1x128xf32>
      %107 = arith.truncf %106 : vector<1x128xf32> to vector<1x128xbf16>
      %c0_86 = arith.constant 0 : index
      %c0_87 = arith.constant 0 : index
      %108 = vector.load %arg3[%c0_86, %c0_87] : memref<128x128xbf16, #tpu.memory_space<vmem>>, vector<128x128xbf16>
      %cst_88 = arith.constant dense<0.000000e+00> : vector<1x128xf32>
      %109 = tpu.matmul %107, %108, %cst_88 {dimension_numbers = #tpu.dot_dimension_numbers<[1], [0], [0], [1], [0, 0, 1, 1], [], []>} : vector<1x128xbf16>, vector<128x128xbf16>, vector<1x128xf32> -> vector<1x128xf32>
      %c0_89 = arith.constant 0 : index
      %c0_90 = arith.constant 0 : index
      %110 = vector.load %arg4[%c0_89, %c0_90] : memref<1x128xf32, #tpu.memory_space<vmem>>, vector<1x128xf32>
      %111 = arith.addf %109, %110 : vector<1x128xf32>
      %cst_91 = arith.constant 0.000000e+00 : f32
      %112 = vector.broadcast %cst_91 : f32 to vector<1x128xf32>
      %113 = arith.maximumf %111, %112 : vector<1x128xf32>
      %c0_92 = arith.constant 0 : index
      %c0_93 = arith.constant 0 : index
      %114 = vector.load %arg9[%c0_92, %c0_93] : memref<1x128xf32, #tpu.memory_space<vmem>>, vector<1x128xf32>
      tpu.vector_store %arg9[%c0_92, %c0_93], %113 {strides = array<i32>} : memref<1x128xf32, #tpu.memory_space<vmem>>, vector<1x128xf32>,
    } else {
    }
    %c0 = arith.constant 0 : index
    %c0_1 = arith.constant 0 : index
    %3 = vector.load %arg9[%c0, %c0_1] : memref<1x128xf32, #tpu.memory_space<vmem>>, vector<1x128xf32>
    %4 = arith.truncf %3 : vector<1x128xf32> to vector<1x128xbf16>
    %c0_2 = arith.constant 0 : index
    %c0_3 = arith.constant 0 : index
    %5 = vector.load %arg5[%c0_2, %c0_3] : memref<128x128xbf16, #tpu.memory_space<vmem>>, vector<128x128xbf16>
    %cst = arith.constant dense<0.000000e+00> : vector<1x128xf32>
    %6 = tpu.matmul %4, %5, %cst {dimension_numbers = #tpu.dot_dimension_numbers<[1], [0], [0], [1], [0, 0, 1, 1], [], []>} : vector<1x128xbf16>, vector<128x128xbf16>, vector<1x128xf32> -> vector<1x128xf32>
    %c0_4 = arith.constant 0 : index
    %c0_5 = arith.constant 0 : index
    %7 = vector.load %arg6[%c0_4, %c0_5] : memref<1x128xf32, #tpu.memory_space<vmem>>, vector<1x128xf32>
    %8 = arith.addf %6, %7 : vector<1x128xf32>
    %9 = arith.index_cast %arg0 : i32 to index
    %c0_6 = arith.constant 0 : index
    %c0_7 = arith.constant 0 : index
    %10 = vector.load %arg10[%9, %c0_6, %c0_7] : memref<2x1x128xf32, #tpu.memory_space<vmem>>, vector<1x1x128xf32>
    %11 = vector.shape_cast %10 : vector<1x1x128xf32> to vector<1x128xf32>
    %12 = vector.shape_cast %8 : vector<1x128xf32> to vector<1x1x128xf32>
    tpu.vector_store %arg10[%9, %c0_6, %c0_7], %12 {strides = array<i32>} : memref<2x1x128xf32, #tpu.memory_space<vmem>>, vector<1x1x128xf32>,
    %c1_i32 = arith.constant 1 : i32
    %13 = arith.cmpi eq, %arg0, %c1_i32 : i32
    %14 = arith.extui %13 : i1 to i32
    %c0_i32_8 = arith.constant 0 : i32
    %15 = arith.cmpi ne, %14, %c0_i32_8 : i32
    scf.if %15 {
      %c0_9 = arith.constant 0 : index
      %c0_10 = arith.constant 0 : index
      %c0_11 = arith.constant 0 : index
      %16 = vector.load %arg10[%c0_9, %c0_10, %c0_11] : memref<2x1x128xf32, #tpu.memory_space<vmem>>, vector<2x1x128xf32>
      %17 = vector.shape_cast %16 : vector<2x1x128xf32> to vector<1x2x1x128xf32>
      %cst_12 = arith.constant dense<0xFF800000> : vector<1xf32>
      %18 = vector.multi_reduction <maximumf>, %17, %cst_12 [1, 2, 3] : vector<1x2x1x128xf32> to vector<1xf32>
      %19 = vector.shape_cast %18 : vector<1xf32> to vector<1x1x1x1xf32>
      %20 = vector.extract %19[0, 0, 0, 0] : f32 from vector<1x1x1x1xf32>
      %21 = vector.broadcast %20 : f32 to vector<2x1x128xf32>
      %22 = arith.subf %16, %21 : vector<2x1x128xf32>
      %23 = math.exp %22 : vector<2x1x128xf32>
      %24 = vector.shape_cast %23 : vector<2x1x128xf32> to vector<1x2x1x128xf32>
      %cst_13 = arith.constant dense<0.000000e+00> : vector<1xf32>
      %25 = vector.multi_reduction <add>, %24, %cst_13 [1, 2, 3] : vector<1x2x1x128xf32> to vector<1xf32>
      %26 = vector.shape_cast %25 : vector<1xf32> to vector<1x1x1x1xf32>
      %27 = vector.extract %26[0, 0, 0, 0] : f32 from vector<1x1x1x1xf32>
      %28 = math.log %27 : f32
      %29 = arith.addf %20, %28 : f32
      %c0_14 = arith.constant 0 : index
      %c0_15 = arith.constant 0 : index
      %c0_16 = arith.constant 0 : index
      %30 = vector.load %arg10[%c0_14, %c0_15, %c0_16] : memref<2x1x128xf32, #tpu.memory_space<vmem>>, vector<1x1x128xf32>
      %31 = vector.shape_cast %30 : vector<1x1x128xf32> to vector<1x128xf32>
      %32 = vector.broadcast %29 : f32 to vector<1x128xf32>
      %33 = arith.subf %31, %32 : vector<1x128xf32>
      %c0_17 = arith.constant 0 : index
      %c0_18 = arith.constant 0 : index
      %34 = vector.load %arg7[%c0_17, %c0_18] : memref<1x256xf32, #tpu.memory_space<vmem>>, vector<1x128xf32>
      tpu.vector_store %arg7[%c0_17, %c0_18], %33 {strides = array<i32>} : memref<1x256xf32, #tpu.memory_space<vmem>>, vector<1x128xf32>,
      %c1 = arith.constant 1 : index
      %c0_19 = arith.constant 0 : index
      %c0_20 = arith.constant 0 : index
      %35 = vector.load %arg10[%c1, %c0_19, %c0_20] : memref<2x1x128xf32, #tpu.memory_space<vmem>>, vector<1x1x128xf32>
      %36 = vector.shape_cast %35 : vector<1x1x128xf32> to vector<1x128xf32>
      %37 = vector.broadcast %29 : f32 to vector<1x128xf32>
      %38 = arith.subf %36, %37 : vector<1x128xf32>
      %c0_21 = arith.constant 0 : index
      %c128 = arith.constant 128 : index
      %39 = vector.load %arg7[%c0_21, %c128] : memref<1x256xf32, #tpu.memory_space<vmem>>, vector<1x128xf32>
      tpu.vector_store %arg7[%c0_21, %c128], %38 {strides = array<i32>} : memref<1x256xf32, #tpu.memory_space<vmem>>, vector<1x128xf32>,
    } else {
    }
    return
  }
  func.func @transform_1(%arg0: i32, %arg1: memref<8xi32, #tpu.memory_space<smem>>) -> (i32, i32) {
    %c0_i32 = arith.constant 0 : i32
    %c0_i32_0 = arith.constant 0 : i32
    %c0_i32_1 = arith.constant 0 : i32
    return %c0_i32, %c0_i32_0 : i32, i32
  }
  func.func @transform_2(%arg0: i32, %arg1: memref<8xi32, #tpu.memory_space<smem>>) -> (i32, i32) {
    %c0_i32 = arith.constant 0 : i32
    %c0_i32_0 = arith.constant 0 : i32
    %c0_i32_1 = arith.constant 0 : i32
    return %c0_i32, %c0_i32_0 : i32, i32
  }
  func.func @transform_3(%arg0: i32, %arg1: memref<8xi32, #tpu.memory_space<smem>>) -> (i32, i32) {
    %c0_i32 = arith.constant 0 : i32
    %c0_i32_0 = arith.constant 0 : i32
    return %c0_i32, %arg0 : i32, i32
  }
  func.func @transform_4(%arg0: i32, %arg1: memref<8xi32, #tpu.memory_space<smem>>) -> (i32, i32) {
    %c0_i32 = arith.constant 0 : i32
    %c0_i32_0 = arith.constant 0 : i32
    return %c0_i32, %arg0 : i32, i32
  }
  func.func @transform_5(%arg0: i32, %arg1: memref<8xi32, #tpu.memory_space<smem>>) -> (i32, i32) {
    %c0_i32 = arith.constant 0 : i32
    %c0_i32_0 = arith.constant 0 : i32
    %c0_i32_1 = arith.constant 0 : i32
    return %c0_i32, %c0_i32_0 : i32, i32
  }
}

</mosaic_0001>

<llo_original>
// kernel: tpu_custom_call.1
$region0: #{tpu_custom_call.1}
  #allocation0 [shape = 'u32[]', space=smem, size = 0x4, offset = 0x4, fixed_abs, tag = 'smem constant byte address 0x4 - core index']
  #allocation1 [shape = 'u32[144,128]{1,0:T(1,128)}', space=vmem, size = 0x12000, scoped, tag = 'internal scratch']
  #allocation2 [shape = 'f32[8,128]{1,0:T(8,128)}', space=vmem, size = 0x1000, scoped, tag = 'scratch operand']
  #allocation3 [shape = 'f32[1,128]{1,0:T(1,128)}', space=vmem, size = 0x200, scoped, tag = 'scratch operand']
  #allocation4 [shape = 'f32[2,1,128]{2,1,0:T(1,128)}', space=vmem, size = 0x400, scoped, tag = 'scratch operand']
  #allocation5 [shape = 's32[8]{0}', space=sflag, size = 0x20, scoped, tag = 'scratch operand']
  #allocation6 [shape = 's32[1]{0}', space=sflag, size = 0x4, scoped, tag = 'scoped memory for tpu_custom_call.1']
  #allocation7 [shape = 'u8[512]{0}', space=smem, size = 0x200, scoped, tag = 'prefetched SMEM operand 0']
  #allocation14 [shape = 's32[]', space=sflag, size = 0x4, offset = 0, fixed_abs, tag = 'sflag constant byte address 0x0 - dummy sync flag']
  #allocation15 [shape = 's32[]', space=sflag, size = 0x4, offset = 0, fixed_abs, tag = 'sflag constant byte address 0x0 - dummy sync flag']
  #allocation16 [shape = 'u32[]', space=smem, size = 0x4, offset = 0x44, fixed_abs, tag = 'smem constant byte address 0x44 - assertion arg 0']
  #allocation17 [shape = 'u32[]', space=smem, size = 0x4, offset = 0x48, fixed_abs, tag = 'smem constant byte address 0x48 - assertion arg 1']
  #allocation18 [shape = 's32[]', space=sflag, size = 0x4, offset = 0, fixed_abs, tag = 'sflag constant byte address 0x0 - dummy sync flag']
  #allocation19 [shape = 's32[]', space=sflag, size = 0x4, offset = 0, fixed_abs, tag = 'sflag constant byte address 0x0 - dummy sync flag']
  #allocation20 [shape = 's32[]', space=sflag, size = 0x4, offset = 0, fixed_abs, tag = 'sflag constant byte address 0x0 - dummy sync flag']
  #allocation21 [shape = 's32[]', space=sflag, size = 0x4, offset = 0, fixed_abs, tag = 'sflag constant byte address 0x0 - dummy sync flag']
  #allocation22 [shape = 's32[]', space=sflag, size = 0x4, offset = 0, fixed_abs, tag = 'sflag constant byte address 0x0 - dummy sync flag']
  #allocation23 [shape = 's32[]', space=sflag, size = 0x4, offset = 0, fixed_abs, tag = 'sflag constant byte address 0x0 - dummy sync flag']
  #allocation24 [shape = 's32[]', space=sflag, size = 0x4, offset = 0, fixed_abs, tag = 'sflag constant byte address 0x0 - dummy sync flag']
  #allocation25 [shape = 's32[]', space=sflag, size = 0x4, offset = 0, fixed_abs, tag = 'sflag constant byte address 0x0 - dummy sync flag']
  #allocation26 [shape = 's32[]', space=sflag, size = 0x4, offset = 0, fixed_abs, tag = 'sflag constant byte address 0x0 - dummy sync flag']
  #allocation27 [shape = 's32[]', space=sflag, size = 0x4, offset = 0, fixed_abs, tag = 'sflag constant byte address 0x0 - dummy sync flag']
  #allocation28 [shape = 's32[]', space=sflag, size = 0x4, offset = 0, fixed_abs, tag = 'sflag constant byte address 0x0 - dummy sync flag']
  #allocation29 [shape = 's32[]', space=sflag, size = 0x4, offset = 0, fixed_abs, tag = 'sflag constant byte address 0x0 - dummy sync flag']
  #allocation30 [shape = 's32[]', space=sflag, size = 0x4, offset = 0, fixed_abs, tag = 'sflag constant byte address 0x0 - dummy sync flag']
  #allocation31 [shape = 's32[]', space=sflag, size = 0x4, offset = 0, fixed_abs, tag = 'sflag constant byte address 0x0 - dummy sync flag']
  %s0 = inlined_call_operand.hbm [shape: s32[8], index: 0, kind: input, shape index: {}]
  %s1 = inlined_call_operand.hbm [shape: f32[256,128], index: 1, kind: input, shape index: {}]
  %s2 = inlined_call_operand.hbm [shape: bf16[128,128], index: 2, kind: input, shape index: {}]
  %s3 = inlined_call_operand.vmem [shape: f32[1,128], index: 3, kind: input, shape index: {}]
  %s4 = inlined_call_operand.hbm [shape: bf16[128,256], index: 4, kind: input, shape index: {}]
  %s5 = inlined_call_operand.vmem [shape: f32[1,256], index: 5, kind: input, shape index: {}]
  %s6 = inlined_call_operand.hbm [shape: f32[1,256], index: 6, kind: output, shape index: {}]
  %s7 = sld [smem:[#allocation0]]
  $region97: #{tpu_custom_call.1} parent=0
    _
  %s9 = ssub.s32 1, %s7
  %s10 = scalar_select 0, %s9, %s7
  %12 = dma.hbm_to_smem %s0, 16, [#allocation7], [#allocation6]
  %13 = dma.done [#allocation6], 16
  %14 = sfence
  $region1: #{tpu_custom_call.1} parent=0
    #allocation8 [shape = 'u8[32768]{0}', space=vmem, size = 0x8000, scoped, tag = 'input window, operand 2, single buffered']
    #allocation9 [shape = 's32[2]{0}', space=sflag, size = 0x8, scoped, tag = 'scoped memory for tpu_custom_call.1']
    #allocation10 [shape = 's32[2]{0}', space=sflag, size = 0x8, scoped, tag = 'scoped memory for tpu_custom_call.1']
    #allocation11 [shape = 'u8[65536]{0}', space=vmem, size = 0x10000, scoped, tag = 'input window, operand 4']
    #allocation12 [shape = 's32[2]{0}', space=sflag, size = 0x8, scoped, tag = 'scoped memory for tpu_custom_call.1']
    #allocation13 [shape = 'u8[1024]{0}', space=vmem, size = 0x400, scoped, tag = 'output window, operand 0, single buffered']
    %15 = vsyncpa [#allocation9], 0
    %16 = vsyncpa [#allocation12], 0
    %s17 = scalar_lea.sflag [#allocation12], 1
    %18 = vsyncpa %s17, 0
    %19 = vsyncpa [#allocation10], 0
    loop: start=0, step=1, limit=4
    $region2: #{tpu_custom_call.1} parent=1 // loop_pre_header
      _
    $region3: #{tpu_custom_call.1} parent=1 // loop_header
      %s21 = sphi 0, %s25
      %p22 = scmp.ge.s32.totalorder %s21, 4
      %s29 = sphi 0, %s29
      %s31 = sphi 0, %s29
      %s32 = sphi 0, %s31
      %s46 = sphi 0, %s32
      %s50 = sphi 0, %s50
      %s52 = sphi 0, %s50
      %s53 = sphi 0, %s52
      %s67 = sphi 0, %s53
      %s73 = sphi 0, %s75
      %s76 = sphi 0, %s73
      %s77 = sphi 0, %s76
      %s93 = sphi 0, %s77
      %s99 = sphi 0, %s101
      %s102 = sphi 0, %s99
      %s103 = sphi 0, %s102
      %s119 = sphi 0, %s103
      %s123 = sphi 0, %s123
      %s125 = sphi 0, %s123
      %s126 = sphi 0, %s125
      %s140 = sphi 0, %s126
    $region4: #{tpu_custom_call.1} parent=1 // loop_header_branch
      %24 = sbr.rel (%p22) target = $region8
    $region5: #{tpu_custom_call.1} parent=1 // loop_body
      %s26 = ssub.s32 %s21, 1
      %s27 = ssub.s32 %s21, 2
      %s28 = sadd.s32 %s21, 1
      %s30 = sadd.s32 %s29, 1
      %p33 = scmp.eq.s32.totalorder %s21, 1
      %p34 = scmp.ne.s32.totalorder %s29, %s31
      %p35 = scmp.eq.s32.totalorder %s21, 0
      %p36 = por %p34, %p35
      %p37 = scmp.ne.s32.totalorder %s29, %s31
      %p38 = scmp.eq.s32.totalorder %s26, 1
      %p39 = por %p37, %p38
      %p40 = scmp.ne.s32.totalorder %s31, %s32
      %p41 = scmp.eq.s32.totalorder %s26, 0
      %p42 = por %p40, %p41
      %p43 = scmp.ne.s32.totalorder %s31, %s32
      %p44 = scmp.eq.s32.totalorder %s27, 1
      %p45 = por %p43, %p44
      %p47 = scmp.ne.s32.totalorder %s32, %s46
      %p48 = scmp.eq.s32.totalorder %s27, 0
      %p49 = por %p47, %p48
      %s51 = sadd.s32 %s50, 1
      %p54 = scmp.eq.s32.totalorder %s21, 1
      %p55 = scmp.ne.s32.totalorder %s50, %s52
      %p56 = scmp.eq.s32.totalorder %s21, 0
      %p57 = por %p55, %p56
      %p58 = scmp.ne.s32.totalorder %s50, %s52
      %p59 = scmp.eq.s32.totalorder %s26, 1
      %p60 = por %p58, %p59
      %p61 = scmp.ne.s32.totalorder %s52, %s53
      %p62 = scmp.eq.s32.totalorder %s26, 0
      %p63 = por %p61, %p62
      %p64 = scmp.ne.s32.totalorder %s52, %s53
      %p65 = scmp.eq.s32.totalorder %s27, 1
      %p66 = por %p64, %p65
      %p68 = scmp.ne.s32.totalorder %s53, %s67
      %p69 = scmp.eq.s32.totalorder %s27, 0
      %p70 = por %p68, %p69
      %s71 = ssub.s32 %s21, %s28
      %p72 = scmp.eq.s32.totalorder %s71, 0
      %s74 = sadd.s32 %s73, 1
      %s75 = scalar_select %p72, %s73, %s74
      %p78 = pneg %p72
      %p79 = scmp.eq.s32.totalorder %s21, 1
      %p80 = por %p78, %p79
      %p81 = scmp.ne.s32.totalorder %s73, %s76
      %p82 = scmp.eq.s32.totalorder %s21, 0
      %p83 = por %p81, %p82
      %p84 = scmp.ne.s32.totalorder %s73, %s76
      %p85 = scmp.eq.s32.totalorder %s26, 1
      %p86 = por %p84, %p85
      %p87 = scmp.ne.s32.totalorder %s76, %s77
      %p88 = scmp.eq.s32.totalorder %s26, 0
      %p89 = por %p87, %p88
      %p90 = scmp.ne.s32.totalorder %s76, %s77
      %p91 = scmp.eq.s32.totalorder %s27, 1
      %p92 = por %p90, %p91
      %p94 = scmp.ne.s32.totalorder %s77, %s93
      %p95 = scmp.eq.s32.totalorder %s27, 0
      %p96 = por %p94, %p95
      %s97 = ssub.s32 %s21, %s28
      %p98 = scmp.eq.s32.totalorder %s97, 0
      %s100 = sadd.s32 %s99, 1
      %s101 = scalar_select %p98, %s99, %s100
      %p104 = pneg %p98
      %p105 = scmp.eq.s32.totalorder %s21, 1
      %p106 = por %p104, %p105
      %p107 = scmp.ne.s32.totalorder %s99, %s102
      %p108 = scmp.eq.s32.totalorder %s21, 0
      %p109 = por %p107, %p108
      %p110 = scmp.ne.s32.totalorder %s99, %s102
      %p111 = scmp.eq.s32.totalorder %s26, 1
      %p112 = por %p110, %p111
      %p113 = scmp.ne.s32.totalorder %s102, %s103
      %p114 = scmp.eq.s32.totalorder %s26, 0
      %p115 = por %p113, %p114
      %p116 = scmp.ne.s32.totalorder %s102, %s103
      %p117 = scmp.eq.s32.totalorder %s27, 1
      %p118 = por %p116, %p117
      %p120 = scmp.ne.s32.totalorder %s103, %s119
      %p121 = scmp.eq.s32.totalorder %s27, 0
      %p122 = por %p120, %p121
      %s124 = sadd.s32 %s123, 1
      %p127 = scmp.eq.s32.totalorder %s21, 1
      %p128 = scmp.ne.s32.totalorder %s123, %s125
      %p129 = scmp.eq.s32.totalorder %s21, 0
      %p130 = por %p128, %p129
      %p131 = scmp.ne.s32.totalorder %s123, %s125
      %p132 = scmp.eq.s32.totalorder %s26, 1
      %p133 = por %p131, %p132
      %p134 = scmp.ne.s32.totalorder %s125, %s126
      %p135 = scmp.eq.s32.totalorder %s26, 0
      %p136 = por %p134, %p135
      %p137 = scmp.ne.s32.totalorder %s125, %s126
      %p138 = scmp.eq.s32.totalorder %s27, 1
      %p139 = por %p137, %p138
      %p141 = scmp.ne.s32.totalorder %s126, %s140
      %p142 = scmp.eq.s32.totalorder %s27, 0
      %p143 = por %p141, %p142
      %p144 = scmp.le.s32.totalorder 1, %s21
      %p145 = scmp.lt.s32.totalorder %s21, 3
      %p146 = pnand %p144, %p145
      %p147 = pneg %p146
      // Predicated region
      $region9: #{tpu_custom_call.1} parent=5 // pred_check
        _
      $region10: #{tpu_custom_call.1} parent=5 // pred_check_branch
        %149 = sbr.rel (%p146) target = $region12
      $region11: #{tpu_custom_call.1} parent=5 // pred_region
        %s150 = ssub.s32 %s21, 1
        // Predicated region
        $region13: #{tpu_custom_call.1} parent=11 // pred_check
          %p151 = pneg %p42
        $region14: #{tpu_custom_call.1} parent=11 // pred_check_branch
          %153 = sbr.rel (%p151) target = $region16
        $region15: #{tpu_custom_call.1} parent=11 // pred_region
          %s155 = ssub.s32 1024, 1024
          %156 = vsyncadd [#allocation9], %s155
          %s157 = sshll.u32 [#allocation8], 4
          %s158 = int_to_ptr.vmem [resolvable:$true] %s157
          %163 = dma.hbm_to_vmem [thread:$0]  %s2, 1024, %s158, [#allocation9], 64, 64, 4
        $region16: #{tpu_custom_call.1} parent=11 // pred_fallthru
          _
        // Predicated region
        $region17: #{tpu_custom_call.1} parent=11 // pred_check
          %p164 = pneg %p63
        $region18: #{tpu_custom_call.1} parent=11 // pred_check_branch
          %166 = sbr.rel (%p164) target = $region20
        $region19: #{tpu_custom_call.1} parent=11 // pred_region
          _
        $region20: #{tpu_custom_call.1} parent=11 // pred_fallthru
          _
      $region12: #{tpu_custom_call.1} parent=5 // pred_fallthru
        _
      %p167 = scmp.lt.s32.totalorder %s21, 2
      // Predicated region
      $region21: #{tpu_custom_call.1} parent=5 // pred_check
        %p168 = pneg %p167
      $region22: #{tpu_custom_call.1} parent=5 // pred_check_branch
        %170 = sbr.rel (%p168) target = $region24
      $region23: #{tpu_custom_call.1} parent=5 // pred_region
        // Predicated region
        $region25: #{tpu_custom_call.1} parent=23 // pred_check
          %p171 = pneg %p83
        $region26: #{tpu_custom_call.1} parent=23 // pred_check_branch
          %173 = sbr.rel (%p171) target = $region28
        $region27: #{tpu_custom_call.1} parent=23 // pred_region
          %s174 = sand.u32 %s73, 1
          %s175 = scalar_lea.sflag [#allocation12], %s174
          %s176 = sand.u32 %s73, 1
          %s177 = smul.addr %s176, 64
          %s178 = scalar_lea.vmem [#allocation11], %s177
          %s180 = ssub.s32 1024, 1024
          %181 = vsyncadd %s175, %s180
          %s182 = smul.addr %s21, 64
          %s183 = scalar_lea.hbm %s4, %s182
          %s184 = sshll.u32 %s178, 4
          %s185 = int_to_ptr.vmem [resolvable:$true] %s184
          %190 = dma.hbm_to_vmem [thread:$0]  %s183, 1024, %s185, %s175, 128, 64, 4
        $region28: #{tpu_custom_call.1} parent=23 // pred_fallthru
          _
        // Predicated region
        $region29: #{tpu_custom_call.1} parent=23 // pred_check
          %p191 = pneg %p109
        $region30: #{tpu_custom_call.1} parent=23 // pred_check_branch
          %193 = sbr.rel (%p191) target = $region32
        $region31: #{tpu_custom_call.1} parent=23 // pred_region
          %p194 = scmp.lt.s32.totalorder %s21, 1
          %s195 = scalar_select %p194, %s21, 1
          %s196 = scalar_lea.vmem %s5, %s195
        $region32: #{tpu_custom_call.1} parent=23 // pred_fallthru
          _
      $region24: #{tpu_custom_call.1} parent=5 // pred_fallthru
        _
      %p197 = scmp.le.s32.totalorder 1, %s21
      %p198 = scmp.lt.s32.totalorder %s21, 3
      %p199 = pnand %p197, %p198
      %p200 = pneg %p199
      // Predicated region
      $region33: #{tpu_custom_call.1} parent=5 // pred_check
        _
      $region34: #{tpu_custom_call.1} parent=5 // pred_check_branch
        %202 = sbr.rel (%p199) target = $region36
      $region35: #{tpu_custom_call.1} parent=5 // pred_region
        %s203 = ssub.s32 %s21, 1
        // Predicated region
        $region37: #{tpu_custom_call.1} parent=35 // pred_check
          %p204 = pneg %p42
        $region38: #{tpu_custom_call.1} parent=35 // pred_check_branch
          %206 = sbr.rel (%p204) target = $region40
        $region39: #{tpu_custom_call.1} parent=35 // pred_region
          %207 = dma.done [#allocation9], 1024
        $region40: #{tpu_custom_call.1} parent=35 // pred_fallthru
          _
        %s208 = sand.u32 %s76, 1
        %s209 = scalar_lea.sflag [#allocation12], %s208
        %s210 = sand.u32 %s76, 1
        %s211 = smul.addr %s210, 64
        %s212 = scalar_lea.vmem [#allocation11], %s211
        // Predicated region
        $region41: #{tpu_custom_call.1} parent=35 // pred_check
          %p213 = pneg %p89
        $region42: #{tpu_custom_call.1} parent=35 // pred_check_branch
          %215 = sbr.rel (%p213) target = $region44
        $region43: #{tpu_custom_call.1} parent=35 // pred_region
          %216 = dma.done %s209, 1024
        $region44: #{tpu_custom_call.1} parent=35 // pred_fallthru
          _
        %p217 = pneg %p42
        %p218 = pneg %p39
        %p219 = pneg %p63
        %p220 = pneg %p60
        %s221 = sand.u32 %s76, 1
        %s222 = scalar_lea.sflag [#allocation12], %s221
        %s223 = sand.u32 %s76, 1
        %s224 = smul.addr %s223, 64
        %s225 = scalar_lea.vmem [#allocation11], %s224
        %p226 = pneg %p89
        %p227 = pneg %p86
        %p228 = scmp.lt.s32.totalorder %s26, 1
        %s229 = scalar_select %p228, %s26, 1
        %s230 = scalar_lea.vmem %s5, %s229
        %p231 = pneg %p115
        %p232 = pneg %p112
        %p233 = pneg %p136
        %p234 = pneg %p133
        %p235 = scmp.lt.s32.totalorder %s26, 1
        %s236 = scalar_select %p235, %s26, 1
        %s237 = scalar_lea.vmem %s5, %s236
        %p239 = scmp.eq.s32.totalorder %s26, 0
        // Predicated region
        $region45: #{tpu_custom_call.1} parent=35 // pred_check
          %p240 = pneg %p239
        $region46: #{tpu_custom_call.1} parent=35 // pred_check_branch
          %242 = sbr.rel (%p240) target = $region48
        $region47: #{tpu_custom_call.1} parent=35 // pred_region
          %s243 = sld [smem:[#allocation7]]
          %p244 = scmp.gt.s32.totalorder %s243, 0
          %s245 = scalar_select %p244, %s243, 0
          %p246 = scmp.lt.s32.totalorder %s245, 255
          %s247 = scalar_select %p246, %s245, 255
          %s248 = smul.addr %s247, 16
          %s249 = scalar_lea.hbm %s1, %s248
          // Predicated region
          $region49: #{tpu_custom_call.1} parent=47 // pred_check
            _
          $region50: #{tpu_custom_call.1} parent=47 // pred_check_branch
            %251 = sbr.rel target = $region52
          $region51: #{tpu_custom_call.1} parent=47 // pred_region
            %252 = sst [smem:[#allocation16]] [#allocation15]
            %253 = sst [smem:[#allocation17]] [#allocation14]
          $region52: #{tpu_custom_call.1} parent=47 // pred_fallthru
            _
          %255 = shalt.err (0)
          %s257 = sshll.u32 [#allocation2], 4
          %s258 = int_to_ptr.vmem [resolvable:$true] %s257
          %260 = dma.hbm_to_vmem [thread:$0]  %s249, 16, %s258, [#allocation5]
          %s261 = sld [smem:[#allocation7 + $0x1]]
          %p262 = scmp.gt.s32.totalorder %s261, 0
          %s263 = scalar_select %p262, %s261, 0
          %p264 = scmp.lt.s32.totalorder %s263, 255
          %s265 = scalar_select %p264, %s263, 255
          %s266 = smul.addr %s265, 16
          %s267 = scalar_lea.hbm %s1, %s266
          %s268 = scalar_lea.vmem [#allocation2], 1
          %s269 = scalar_lea.sflag [#allocation5], 1
          // Predicated region
          $region53: #{tpu_custom_call.1} parent=47 // pred_check
            _
          $region54: #{tpu_custom_call.1} parent=47 // pred_check_branch
            %271 = sbr.rel target = $region56
          $region55: #{tpu_custom_call.1} parent=47 // pred_region
            %272 = sst [smem:[#allocation16]] [#allocation19]
            %273 = sst [smem:[#allocation17]] [#allocation18]
          $region56: #{tpu_custom_call.1} parent=47 // pred_fallthru
            _
          %275 = shalt.err (0)
          %s277 = sshll.u32 %s268, 4
          %s278 = int_to_ptr.vmem [resolvable:$true] %s277
          %280 = dma.hbm_to_vmem [thread:$0]  %s267, 16, %s278, %s269
          %s281 = sld [smem:[#allocation7 + $0x2]]
          %p282 = scmp.gt.s32.totalorder %s281, 0
          %s283 = scalar_select %p282, %s281, 0
          %p284 = scmp.lt.s32.totalorder %s283, 255
          %s285 = scalar_select %p284, %s283, 255
          %s286 = smul.addr %s285, 16
          %s287 = scalar_lea.hbm %s1, %s286
          %s288 = scalar_lea.vmem [#allocation2], 2
          %s289 = scalar_lea.sflag [#allocation5], 2
          // Predicated region
          $region57: #{tpu_custom_call.1} parent=47 // pred_check
            _
          $region58: #{tpu_custom_call.1} parent=47 // pred_check_branch
            %291 = sbr.rel target = $region60
          $region59: #{tpu_custom_call.1} parent=47 // pred_region
            %292 = sst [smem:[#allocation16]] [#allocation21]
            %293 = sst [smem:[#allocation17]] [#allocation20]
          $region60: #{tpu_custom_call.1} parent=47 // pred_fallthru
            _
          %295 = shalt.err (0)
          %s297 = sshll.u32 %s288, 4
          %s298 = int_to_ptr.vmem [resolvable:$true] %s297
          %300 = dma.hbm_to_vmem [thread:$0]  %s287, 16, %s298, %s289
          %s301 = sld [smem:[#allocation7 + $0x3]]
          %p302 = scmp.gt.s32.totalorder %s301, 0
          %s303 = scalar_select %p302, %s301, 0
          %p304 = scmp.lt.s32.totalorder %s303, 255
          %s305 = scalar_select %p304, %s303, 255
          %s306 = smul.addr %s305, 16
          %s307 = scalar_lea.hbm %s1, %s306
          %s308 = scalar_lea.vmem [#allocation2], 3
          %s309 = scalar_lea.sflag [#allocation5], 3
          // Predicated region
          $region61: #{tpu_custom_call.1} parent=47 // pred_check
            _
          $region62: #{tpu_custom_call.1} parent=47 // pred_check_branch
            %311 = sbr.rel target = $region64
          $region63: #{tpu_custom_call.1} parent=47 // pred_region
            %312 = sst [smem:[#allocation16]] [#allocation23]
            %313 = sst [smem:[#allocation17]] [#allocation22]
          $region64: #{tpu_custom_call.1} parent=47 // pred_fallthru
            _
          %315 = shalt.err (0)
          %s317 = sshll.u32 %s308, 4
          %s318 = int_to_ptr.vmem [resolvable:$true] %s317
          %320 = dma.hbm_to_vmem [thread:$0]  %s307, 16, %s318, %s309
          %s321 = sld [smem:[#allocation7 + $0x4]]
          %p322 = scmp.gt.s32.totalorder %s321, 0
          %s323 = scalar_select %p322, %s321, 0
          %p324 = scmp.lt.s32.totalorder %s323, 255
          %s325 = scalar_select %p324, %s323, 255
          %s326 = smul.addr %s325, 16
          %s327 = scalar_lea.hbm %s1, %s326
          %s328 = scalar_lea.vmem [#allocation2], 4
          %s329 = scalar_lea.sflag [#allocation5], 4
          // Predicated region
          $region65: #{tpu_custom_call.1} parent=47 // pred_check
            _
          $region66: #{tpu_custom_call.1} parent=47 // pred_check_branch
            %331 = sbr.rel target = $region68
          $region67: #{tpu_custom_call.1} parent=47 // pred_region
            %332 = sst [smem:[#allocation16]] [#allocation25]
            %333 = sst [smem:[#allocation17]] [#allocation24]
          $region68: #{tpu_custom_call.1} parent=47 // pred_fallthru
            _
          %335 = shalt.err (0)
          %s337 = sshll.u32 %s328, 4
          %s338 = int_to_ptr.vmem [resolvable:$true] %s337
          %340 = dma.hbm_to_vmem [thread:$0]  %s327, 16, %s338, %s329
          %s341 = sld [smem:[#allocation7 + $0x5]]
          %p342 = scmp.gt.s32.totalorder %s341, 0
          %s343 = scalar_select %p342, %s341, 0
          %p344 = scmp.lt.s32.totalorder %s343, 255
          %s345 = scalar_select %p344, %s343, 255
          %s346 = smul.addr %s345, 16
          %s347 = scalar_lea.hbm %s1, %s346
          %s348 = scalar_lea.vmem [#allocation2], 5
          %s349 = scalar_lea.sflag [#allocation5], 5
          // Predicated region
          $region69: #{tpu_custom_call.1} parent=47 // pred_check
            _
          $region70: #{tpu_custom_call.1} parent=47 // pred_check_branch
            %351 = sbr.rel target = $region72
          $region71: #{tpu_custom_call.1} parent=47 // pred_region
            %352 = sst [smem:[#allocation16]] [#allocation27]
            %353 = sst [smem:[#allocation17]] [#allocation26]
          $region72: #{tpu_custom_call.1} parent=47 // pred_fallthru
            _
          %355 = shalt.err (0)
          %s357 = sshll.u32 %s348, 4
          %s358 = int_to_ptr.vmem [resolvable:$true] %s357
          %360 = dma.hbm_to_vmem [thread:$0]  %s347, 16, %s358, %s349
          %s361 = sld [smem:[#allocation7 + $0x6]]
          %p362 = scmp.gt.s32.totalorder %s361, 0
          %s363 = scalar_select %p362, %s361, 0
          %p364 = scmp.lt.s32.totalorder %s363, 255
          %s365 = scalar_select %p364, %s363, 255
          %s366 = smul.addr %s365, 16
          %s367 = scalar_lea.hbm %s1, %s366
          %s368 = scalar_lea.vmem [#allocation2], 6
          %s369 = scalar_lea.sflag [#allocation5], 6
          // Predicated region
          $region73: #{tpu_custom_call.1} parent=47 // pred_check
            _
          $region74: #{tpu_custom_call.1} parent=47 // pred_check_branch
            %371 = sbr.rel target = $region76
          $region75: #{tpu_custom_call.1} parent=47 // pred_region
            %372 = sst [smem:[#allocation16]] [#allocation29]
            %373 = sst [smem:[#allocation17]] [#allocation28]
          $region76: #{tpu_custom_call.1} parent=47 // pred_fallthru
            _
          %375 = shalt.err (0)
          %s377 = sshll.u32 %s368, 4
          %s378 = int_to_ptr.vmem [resolvable:$true] %s377
          %380 = dma.hbm_to_vmem [thread:$0]  %s367, 16, %s378, %s369
          %s381 = sld [smem:[#allocation7 + $0x7]]
          %p382 = scmp.gt.s32.totalorder %s381, 0
          %s383 = scalar_select %p382, %s381, 0
          %p384 = scmp.lt.s32.totalorder %s383, 255
          %s385 = scalar_select %p384, %s383, 255
          %s386 = smul.addr %s385, 16
          %s387 = scalar_lea.hbm %s1, %s386
          %s388 = scalar_lea.vmem [#allocation2], 7
          %s389 = scalar_lea.sflag [#allocation5], 7
          // Predicated region
          $region77: #{tpu_custom_call.1} parent=47 // pred_check
            _
          $region78: #{tpu_custom_call.1} parent=47 // pred_check_branch
            %391 = sbr.rel target = $region80
          $region79: #{tpu_custom_call.1} parent=47 // pred_region
            %392 = sst [smem:[#allocation16]] [#allocation31]
            %393 = sst [smem:[#allocation17]] [#allocation30]
          $region80: #{tpu_custom_call.1} parent=47 // pred_fallthru
            _
          %395 = shalt.err (0)
          %s397 = sshll.u32 %s388, 4
          %s398 = int_to_ptr.vmem [resolvable:$true] %s397
          %400 = dma.hbm_to_vmem [thread:$0]  %s387, 16, %s398, %s389
          %s401 = smul.u32 1, 1
          %s402 = sshll.u32 %s401, 4
          %403 = dma.done [#allocation5], %s402
          %s404 = sshll.u32 %s401, 4
          %405 = dma.done %s269, %s404
          %s406 = sshll.u32 %s401, 4
          %407 = dma.done %s289, %s406
          %s408 = sshll.u32 %s401, 4
          %409 = dma.done %s309, %s408
          %s410 = sshll.u32 %s401, 4
          %411 = dma.done %s329, %s410
          %s412 = sshll.u32 %s401, 4
          %413 = dma.done %s349, %s412
          %s414 = sshll.u32 %s401, 4
          %415 = dma.done %s369, %s414
          %s416 = sshll.u32 %s401, 4
          %417 = dma.done %s389, %s416
          %v418 = vld [vmem:[#allocation2] sm:$0xff]
          %v419 = vrot.slane %v418, 4
          %v420 = vadd.f32 %v418, %v419
          %v421 = vrot.slane %v420, 2
          %v422 = vadd.f32 %v420, %v421
          %v423 = vrot.slane %v422, 1
          %v424 = vadd.f32 %v422, %v423
          %v425 = vpack.c.bf16 %v424, %v424
          %v426 = vld [vmem:[#allocation8] sm:$0xf]
          %v427 = vld [vmem:[#allocation8 + $0x4] sm:$0xf]
          %v428 = vld [vmem:[#allocation8 + $0x8] sm:$0xf]
          %v429 = vld [vmem:[#allocation8 + $0xc] sm:$0xf]
          %v430 = vld [vmem:[#allocation8 + $0x10] sm:$0xf]
          %v431 = vld [vmem:[#allocation8 + $0x14] sm:$0xf]
          %v432 = vld [vmem:[#allocation8 + $0x18] sm:$0xf]
          %v433 = vld [vmem:[#allocation8 + $0x1c] sm:$0xf]
          %v434 = vld [vmem:[#allocation8 + $0x20] sm:$0xf]
          %v435 = vld [vmem:[#allocation8 + $0x24] sm:$0xf]
          %v436 = vld [vmem:[#allocation8 + $0x28] sm:$0xf]
          %v437 = vld [vmem:[#allocation8 + $0x2c] sm:$0xf]
          %v438 = vld [vmem:[#allocation8 + $0x30] sm:$0xf]
          %v439 = vld [vmem:[#allocation8 + $0x34] sm:$0xf]
          %v440 = vld [vmem:[#allocation8 + $0x38] sm:$0xf]
          %v441 = vld [vmem:[#allocation8 + $0x3c] sm:$0xf]
          %v442 = vld [vmem:[%s3] sm:$0x1]
          %v459 = vunpack.c.l.b16 %v426
          %v460 = vunpack.c.l.b16 %v427
          %v461 = vunpack.c.l.b16 %v428
          %v462 = vunpack.c.l.b16 %v429
          %v463 = vunpack.c.l.b16 %v430
          %v464 = vunpack.c.l.b16 %v431
          %v465 = vunpack.c.l.b16 %v432
          %v466 = vunpack.c.l.b16 %v433
          %v467 = vunpack.c.l.b16 %v434
          %v468 = vunpack.c.l.b16 %v435
          %v469 = vunpack.c.l.b16 %v436
          %v470 = vunpack.c.l.b16 %v437
          %v471 = vunpack.c.l.b16 %v438
          %v472 = vunpack.c.l.b16 %v439
          %v473 = vunpack.c.l.b16 %v440
          %v474 = vunpack.c.l.b16 %v441
          %v475 = vpack.c.b16 %v460, %v459
          %v476 = vpack.c.b16 %v462, %v461
          %v477 = vpack.c.b16 %v464, %v463
          %v478 = vpack.c.b16 %v466, %v465
          %v479 = vpack.c.b16 %v468, %v467
          %v480 = vpack.c.b16 %v470, %v469
          %v481 = vpack.c.b16 %v472, %v471
          %v482 = vpack.c.b16 %v474, %v473
          %491 = vmatprep.subr.bf16.mxu0 0
          %492 = vmatpush1.bf16.msra.mxu0 %v475
          %493 = vmatprep.subr.bf16.mxu0 0
          %494 = vmatpush1.bf16.msra.mxu0 %v476
          %495 = vmatprep.subr.bf16.mxu0 0
          %496 = vmatpush1.bf16.msra.mxu0 %v477
          %497 = vmatprep.subr.bf16.mxu0 0
          %498 = vmatpush1.bf16.msra.mxu0 %v478
          %499 = vmatprep.subr.bf16.mxu0 0
          %500 = vmatpush1.bf16.msra.mxu0 %v479
          %501 = vmatprep.subr.bf16.mxu0 0
          %502 = vmatpush1.bf16.msra.mxu0 %v480
          %503 = vmatprep.subr.bf16.mxu0 0
          %504 = vmatpush1.bf16.msra.mxu0 %v481
          %505 = vmatprep.subr.bf16.mxu0 0
          %506 = vmatpush1.bf16.msra.mxu0 %v482
          %507 = vmatprep.subr.bf16.mxu0 0
          %508 = vmatpush1.bf16.msra.mxu0 0
          %509 = vmatprep.subr.bf16.mxu0 0
          %510 = vmatpush1.bf16.msra.mxu0 0
          %511 = vmatprep.subr.bf16.mxu0 0
          %512 = vmatpush1.bf16.msra.mxu0 0
          %513 = vmatprep.subr.bf16.mxu0 0
          %514 = vmatpush1.bf16.msra.mxu0 0
          %515 = vmatprep.subr.bf16.mxu0 0
          %516 = vmatpush1.bf16.msra.mxu0 0
          %517 = vmatprep.subr.bf16.mxu0 0
          %518 = vmatpush1.bf16.msra.mxu0 0
          %519 = vmatprep.subr.bf16.mxu0 0
          %520 = vmatpush1.bf16.msra.mxu0 0
          %521 = vmatprep.subr.bf16.mxu0 0
          %522 = vmatpush1.bf16.msra.mxu0 0
          %523 = vmatprep.mubr.bf16.mxu0 0
          %524 = vmatmul.mubr.bf16.gmra.mrb[0].mxu0 %v425
          %v525 = vpop.f32.mrb[0].mxu0
          %v526 = vadd.f32 %v442, %v525
          %v527 = vpop.f32.mrb[0].mxu0
          %v528 = vpop.f32.mrb[0].mxu0
          %v529 = vpop.f32.mrb[0].mxu0
          %530 = vdwg.mxu0
          %v531 = vmax.f32 %v526, 0.0
          %532 = vst [vmem:[#allocation3] sm:$0x1] %v531
        $region48: #{tpu_custom_call.1} parent=35 // pred_fallthru
          _
        %v533 = vld [vmem:[#allocation3] sm:$0x1]
        %v534 = vpack.c.bf16 %v533, %v533
        %v535 = vld [vmem:[%s212] sm:$0xf]
        %v536 = vld [vmem:[%s212 + $0x4] sm:$0xf]
        %v537 = vld [vmem:[%s212 + $0x8] sm:$0xf]
        %v538 = vld [vmem:[%s212 + $0xc] sm:$0xf]
        %v539 = vld [vmem:[%s212 + $0x10] sm:$0xf]
        %v540 = vld [vmem:[%s212 + $0x14] sm:$0xf]
        %v541 = vld [vmem:[%s212 + $0x18] sm:$0xf]
        %v542 = vld [vmem:[%s212 + $0x1c] sm:$0xf]
        %v543 = vld [vmem:[%s212 + $0x20] sm:$0xf]
        %v544 = vld [vmem:[%s212 + $0x24] sm:$0xf]
        %v545 = vld [vmem:[%s212 + $0x28] sm:$0xf]
        %v546 = vld [vmem:[%s212 + $0x2c] sm:$0xf]
        %v547 = vld [vmem:[%s212 + $0x30] sm:$0xf]
        %v548 = vld [vmem:[%s212 + $0x34] sm:$0xf]
        %v549 = vld [vmem:[%s212 + $0x38] sm:$0xf]
        %v550 = vld [vmem:[%s212 + $0x3c] sm:$0xf]
        %v551 = vld [vmem:[%s237] sm:$0x1]
        %v568 = vunpack.c.l.b16 %v535
        %v569 = vunpack.c.l.b16 %v536
        %v570 = vunpack.c.l.b16 %v537
        %v571 = vunpack.c.l.b16 %v538
        %v572 = vunpack.c.l.b16 %v539
        %v573 = vunpack.c.l.b16 %v540
        %v574 = vunpack.c.l.b16 %v541
        %v575 = vunpack.c.l.b16 %v542
        %v576 = vunpack.c.l.b16 %v543
        %v577 = vunpack.c.l.b16 %v544
        %v578 = vunpack.c.l.b16 %v545
        %v579 = vunpack.c.l.b16 %v546
        %v580 = vunpack.c.l.b16 %v547
        %v581 = vunpack.c.l.b16 %v548
        %v582 = vunpack.c.l.b16 %v549
        %v583 = vunpack.c.l.b16 %v550
        %v584 = vpack.c.b16 %v569, %v568
        %v585 = vpack.c.b16 %v571, %v570
        %v586 = vpack.c.b16 %v573, %v572
        %v587 = vpack.c.b16 %v575, %v574
        %v588 = vpack.c.b16 %v577, %v576
        %v589 = vpack.c.b16 %v579, %v578
        %v590 = vpack.c.b16 %v581, %v580
        %v591 = vpack.c.b16 %v583, %v582
        %600 = vmatprep.subr.bf16.mxu0 0
        %601 = vmatpush1.bf16.msra.mxu0 %v584
        %602 = vmatprep.subr.bf16.mxu0 0
        %603 = vmatpush1.bf16.msra.mxu0 %v585
        %604 = vmatprep.subr.bf16.mxu0 0
        %605 = vmatpush1.bf16.msra.mxu0 %v586
        %606 = vmatprep.subr.bf16.mxu0 0
        %607 = vmatpush1.bf16.msra.mxu0 %v587
        %608 = vmatprep.subr.bf16.mxu0 0
        %609 = vmatpush1.bf16.msra.mxu0 %v588
        %610 = vmatprep.subr.bf16.mxu0 0
        %611 = vmatpush1.bf16.msra.mxu0 %v589
        %612 = vmatprep.subr.bf16.mxu0 0
        %613 = vmatpush1.bf16.msra.mxu0 %v590
        %614 = vmatprep.subr.bf16.mxu0 0
        %615 = vmatpush1.bf16.msra.mxu0 %v591
        %616 = vmatprep.subr.bf16.mxu0 0
        %617 = vmatpush1.bf16.msra.mxu0 0
        %618 = vmatprep.subr.bf16.mxu0 0
        %619 = vmatpush1.bf16.msra.mxu0 0
        %620 = vmatprep.subr.bf16.mxu0 0
        %621 = vmatpush1.bf16.msra.mxu0 0
        %622 = vmatprep.subr.bf16.mxu0 0
        %623 = vmatpush1.bf16.msra.mxu0 0
        %624 = vmatprep.subr.bf16.mxu0 0
        %625 = vmatpush1.bf16.msra.mxu0 0
        %626 = vmatprep.subr.bf16.mxu0 0
        %627 = vmatpush1.bf16.msra.mxu0 0
        %628 = vmatprep.subr.bf16.mxu0 0
        %629 = vmatpush1.bf16.msra.mxu0 0
        %630 = vmatprep.subr.bf16.mxu0 0
        %631 = vmatpush1.bf16.msra.mxu0 0
        %632 = vmatprep.mubr.bf16.mxu0 0
        %633 = vmatmul.mubr.bf16.gmra.mrb[0].mxu0 %v534
        %v634 = vpop.f32.mrb[0].mxu0
        %v635 = vadd.f32 %v551, %v634
        %v636 = vpop.f32.mrb[0].mxu0
        %v637 = vpop.f32.mrb[0].mxu0
        %v638 = vpop.f32.mrb[0].mxu0
        %639 = vdwg.mxu0
        %s640 = scalar_lea.vmem [#allocation4], %s26
        %641 = vst [vmem:[%s640] sm:$0x1] %v635
        %p642 = scmp.eq.s32.totalorder %s26, 1
        // Predicated region
        $region81: #{tpu_custom_call.1} parent=35 // pred_check
          %p643 = pneg %p642
        $region82: #{tpu_custom_call.1} parent=35 // pred_check_branch
          %645 = sbr.rel (%p643) target = $region84
        $region83: #{tpu_custom_call.1} parent=35 // pred_region
          %v646 = vld [vmem:[#allocation4] sm:$0x1]
          %v647 = vld [vmem:[#allocation4 + $0x1] sm:$0x1]
          %vm648 = vcmask 1040384
          %v649 = vsel %vm648, %v646, -inf
          %v650 = vsel %vm648, %v647, -inf
          %v651 = vmax.f32 %v649, %v650
          %652 = vmax.xlane.f32.xlu0 %v651
          %v653 = vpop.xlane.xlu0 %652
          %v654 = vrot.slane %v653, 4
          %v655 = vmax.f32 %v653, %v654
          %v656 = vrot.slane %v655, 2
          %v657 = vmax.f32 %v655, %v656
          %v658 = vrot.slane %v657, 1
          %v659 = vmax.f32 %v657, %v658
          %s660 = vtos %v659
          %v661 = vstv %s660
          %v662 = vsub.f32 %v646, %v661
          %v663 = vsub.f32 %v647, %v661
          %v664 = vmul.f32 %v662, 1.442695
          %v665 = vpow.pop %v664
          %v666 = vmul.f32 %v663, 1.442695
          %v667 = vpow.pop %v666
          %v668 = vsel %vm648, %v665, 0.0
          %v669 = vsel %vm648, %v667, 0.0
          %v670 = vadd.f32 %v668, %v669
          %671 = vadd.xlane.f32.xlu0 %v670
          %v672 = vpop.xlane.xlu0 %671
          %v673 = vrot.slane %v672, 4
          %v674 = vadd.f32 %v672, %v673
          %v675 = vrot.slane %v674, 2
          %v676 = vadd.f32 %v674, %v675
          %v677 = vrot.slane %v676, 1
          %v678 = vadd.f32 %v676, %v677
          %s679 = vtos %v678
          %v680 = vstv %s679
          %v681 = vlog2.pop %v680
          %v682 = vmul.f32 %v681, 0.6931472
          %s683 = vtos %v682
          %s684 = sadd.f32 %s660, %s683
          %v685 = vld [vmem:[#allocation4] sm:$0x1]
          %v686 = vstv %s684
          %v687 = vsub.f32 %v685, %v686
          %v688 = vlaneseq
          %vm689 = vcmp.ge.s32.totalorder %v688, 0
          %vm690 = vcmp.lt.s32.totalorder %v688, 128
          %vm691 = vmand %vm689, %vm690
          %692 = vst.msk [vmem:[#allocation13] sm:$0x1] %vm691, %v687
          %s693 = scalar_lea.vmem [#allocation4], 1
          %v694 = vld [vmem:[%s693] sm:$0x1]
          %v695 = vsub.f32 %v694, %v686
          %696 = vst.msk [vmem:[#allocation13 + $0x1] sm:$0x1] %vm691, %v695
        $region84: #{tpu_custom_call.1} parent=35 // pred_fallthru
          _
        // Predicated region
        $region85: #{tpu_custom_call.1} parent=35 // pred_check
          %p697 = pneg %p133
        $region86: #{tpu_custom_call.1} parent=35 // pred_check_branch
          %699 = sbr.rel (%p697) target = $region88
        $region87: #{tpu_custom_call.1} parent=35 // pred_region
          %s701 = ssub.s32 32, 32
          %702 = vsyncadd [#allocation10], %s701
          %s704 = sshll.u32 [#allocation13], 4
          %s705 = int_to_ptr.vmem [resolvable:$true] %s704
          %707 = dma.vmem_to_hbm [thread:$0]  %s705, 32, %s6, [#allocation10]
        $region88: #{tpu_custom_call.1} parent=35 // pred_fallthru
          _
        // Predicated region
        $region89: #{tpu_custom_call.1} parent=35 // pred_check
          %p708 = pneg %p133
        $region90: #{tpu_custom_call.1} parent=35 // pred_check_branch
          %710 = sbr.rel (%p708) target = $region92
        $region91: #{tpu_custom_call.1} parent=35 // pred_region
          %711 = dma.done [#allocation10], 32
        $region92: #{tpu_custom_call.1} parent=35 // pred_fallthru
          _
      $region36: #{tpu_custom_call.1} parent=5 // pred_fallthru
        _
      %p712 = scmp.le.s32.totalorder 2, %s21
      // Predicated region
      $region93: #{tpu_custom_call.1} parent=5 // pred_check
        %p713 = pneg %p712
      $region94: #{tpu_custom_call.1} parent=5 // pred_check_branch
        %715 = sbr.rel (%p713) target = $region96
      $region95: #{tpu_custom_call.1} parent=5 // pred_region
        %s716 = ssub.s32 %s21, 2
      $region96: #{tpu_custom_call.1} parent=5 // pred_fallthru
        _
    $region6: #{tpu_custom_call.1} parent=1 // loop_footer
      %s25 = sadd.s32 1, %s21
    $region7: #{tpu_custom_call.1} parent=1 // loop_footer_branch
      %20 = sbr.rel target = $region3
    $region8: #{tpu_custom_call.1} parent=1 // loop_exit
      _
    %717 = vsyncpa [#allocation9], 1
    %s718 = scalar_lea.sflag [#allocation9], 1
    %719 = vsyncpa %s718, 1
    %720 = vsyncpa [#allocation12], 1
    %s721 = scalar_lea.sflag [#allocation12], 1
    %722 = vsyncpa %s721, 1
    %723 = vsyncpa [#allocation10], 1
    %s724 = scalar_lea.sflag [#allocation10], 1
    %725 = vsyncpa %s724, 1
  %726 = vsyncmov [#allocation5]
  %s727 = vpop.sfrf %726
  %p728 = scmp.eq.s32.totalorder %s727, 0
  %p729 = pneg %p728
  %731 = shalt.err (%p729)
  %s732 = scalar_lea.sflag [#allocation5], 1
  %733 = vsyncmov %s732
  %s734 = vpop.sfrf %733
  %p735 = scmp.eq.s32.totalorder %s734, 0
  %p736 = pneg %p735
  %738 = shalt.err (%p736)
  %s739 = scalar_lea.sflag [#allocation5], 2
  %740 = vsyncmov %s739
  %s741 = vpop.sfrf %740
  %p742 = scmp.eq.s32.totalorder %s741, 0
  %p743 = pneg %p742
  %745 = shalt.err (%p743)
  %s746 = scalar_lea.sflag [#allocation5], 3
  %747 = vsyncmov %s746
  %s748 = vpop.sfrf %747
  %p749 = scmp.eq.s32.totalorder %s748, 0
  %p750 = pneg %p749
  %752 = shalt.err (%p750)
  %s753 = scalar_lea.sflag [#allocation5], 4
  %754 = vsyncmov %s753
  %s755 = vpop.sfrf %754
  %p756 = scmp.eq.s32.totalorder %s755, 0
  %p757 = pneg %p756
  %759 = shalt.err (%p757)
  %s760 = scalar_lea.sflag [#allocation5], 5
  %761 = vsyncmov %s760
  %s762 = vpop.sfrf %761
  %p763 = scmp.eq.s32.totalorder %s762, 0
  %p764 = pneg %p763
  %766 = shalt.err (%p764)
  %s767 = scalar_lea.sflag [#allocation5], 6
  %768 = vsyncmov %s767
  %s769 = vpop.sfrf %768
  %p770 = scmp.eq.s32.totalorder %s769, 0
  %p771 = pneg %p770
  %773 = shalt.err (%p771)
  %s774 = scalar_lea.sflag [#allocation5], 7
  %775 = vsyncmov %s774
  %s776 = vpop.sfrf %775
  %p777 = scmp.eq.s32.totalorder %s776, 0
  %p778 = pneg %p777
  %780 = shalt.err (%p778)

</llo_original>
